<compile_context>
chip_gen: v6e
topology: v6e:2x2x1
jax: 0.10.0
libtpu: 0.0.40
codegen_flags: <defaults>
</compile_context>

<pallas_src>
import math
from functools import partial

import jax
import jax.numpy as jnp
from jax.experimental import pallas as pl
from jax.experimental.pallas import tpu as pltpu


# --------------------------------------------------------------------------
# Kernel 1: fused multi-head self-attention + attentive statistics pooling.
# One grid step per Bb-sized batch block; produces mean and std (Bb, D) slabs.
# --------------------------------------------------------------------------
def _attn_pool_kernel(x_ref, mask_ref, wqkv_ref, bqkv_ref, wo_ref, bo_ref,
                      wp_ref, bp_ref, mean_ref, std_ref,
                      *, num_heads, head_dim, mask_scores, softmax_dtype):
    x = x_ref[...]                                   # (Bb, T, D) bf16
    Bb, T, D = x.shape
    x2 = x.reshape(Bb * T, D)                        # T padded to 16 -> clean tiles
    mask = mask_ref[...]                             # (Bb, T) f32
    scale = 1.0 / math.sqrt(head_dim)

    # TODO(synk): full-T attention (no flash/KV tiling); add a KV-tiled online
    #             softmax for large T on v7x (64 MiB VMEM).
    def head_body(h, acc):
        # fused per-head QKV projection: one MXU matmul with N = 3*dh lanes.
        qkv = (jnp.dot(x2, wqkv_ref[h], preferred_element_type=jnp.float32)
               + bqkv_ref[h]).astype(jnp.bfloat16)               # (Bb*T, 3*dh)
        qkv = qkv.reshape(Bb, T, 3 * head_dim)
        q = qkv[:, :, 0 * head_dim:1 * head_dim]
        k = qkv[:, :, 1 * head_dim:2 * head_dim]
        v = qkv[:, :, 2 * head_dim:3 * head_dim]
        # scores via contraction of last dims (no explicit k.T transpose)
        s = jnp.einsum('bte,bse->bts', q, k,
                       preferred_element_type=jnp.float32) * scale   # (Bb,T,T) f32
        if mask_scores:
            # only hides the internal T-padding columns (reference uses mask=None)
            s = jnp.where(mask[:, None, :] > 0, s, -1e30)
        s = s - jnp.max(s, axis=-1, keepdims=True)
        p = jnp.exp(s.astype(softmax_dtype))                     # bf16 on v6e/v7x
        denom = jnp.sum(p, axis=-1, keepdims=True, dtype=jnp.float32)  # (Bb,T,1)
        o = jnp.einsum('bts,bse->bte', p.astype(jnp.bfloat16), v,
                       preferred_element_type=jnp.float32)       # (Bb,T,dh) f32
        # normalize the small (Bb,T,dh) output instead of the (Bb,T,T) probs
        o = o * pl.reciprocal(denom, approx=True)
        # fold the head concat into the output projection: attn = sum_h o_h @ Wo_h
        return acc + jnp.dot(o.astype(jnp.bfloat16).reshape(Bb * T, head_dim),
                             wo_ref[h], preferred_element_type=jnp.float32)

    acc = jax.lax.fori_loop(0, num_heads, head_body,
                            jnp.zeros((Bb * T, D), jnp.float32))
    attn_out = (acc + bo_ref[...]).astype(jnp.bfloat16).reshape(Bb, T, D)

    # ---- SelfAttentionPooling (attentive statistics), lane-dense (Bb, T) path ----
    logits = jnp.sum(attn_out * wp_ref[...], axis=-1) + bp_ref[...]  # (Bb, T) f32
    logits = jnp.where(mask > 0, logits, -1e30)
    logits = logits - jnp.max(logits, axis=-1, keepdims=True)
    w = jnp.exp(logits)
    w = w * pl.reciprocal(jnp.sum(w, axis=-1, keepdims=True), approx=True)

    # T-reduction on the MXU (K = T, N = D lane-dense), f32 accumulation.
    w3 = w.astype(jnp.bfloat16)[:, None, :]                          # (Bb, 1, T)
    mean = jnp.einsum('bqt,btd->bqd', w3, attn_out,
                      preferred_element_type=jnp.float32)[:, 0]      # (Bb, D)
    meansq = jnp.einsum('bqt,btd->bqd', w3, attn_out * attn_out,
                        preferred_element_type=jnp.float32)[:, 0]
    std = jnp.sqrt(jnp.maximum(meansq - mean * mean, 1e-9))
    mean_ref[...] = mean
    std_ref[...] = std


# --------------------------------------------------------------------------
# Kernel 2: emb Linear -> BatchNorm1d (batch stats) -> ReLU -> classifier.
# F-tiled grid ("arbitrary": the classifier reduces over F into a resident,
# 128-lane-padded logits block).  BN statistics are per-feature -> exact.
# --------------------------------------------------------------------------
def _head_kernel(mean_ref, std_ref, wem_ref, wes_ref, be_ref, g_ref, bt_ref,
                 wc_ref, bc_ref, logits_ref, emb_ref):
    f = pl.program_id(0)
    e = (jnp.dot(mean_ref[...], wem_ref[...], preferred_element_type=jnp.float32)
         + jnp.dot(std_ref[...], wes_ref[...], preferred_element_type=jnp.float32)
         + be_ref[...])                                              # (B, TF) f32
    # BatchNorm1d, training-mode semantics: biased batch variance, eps = 1e-5.
    # TODO(synk): running_mean / running_var updates are not emitted.
    mu = jnp.mean(e, axis=0, keepdims=True)
    var = jnp.mean((e - mu) * (e - mu), axis=0, keepdims=True)
    e = (e - mu) * jax.lax.rsqrt(var + 1e-5) * g_ref[...] + bt_ref[...]
    e = jnp.maximum(e, 0.0)                                          # ReLU
    emb_ref[...] = e

    @pl.when(f == 0)
    def _():
        logits_ref[...] = jnp.broadcast_to(bc_ref[...], logits_ref.shape)

    logits_ref[...] += jnp.dot(e.astype(jnp.bfloat16), wc_ref[...],
                               preferred_element_type=jnp.float32)


# --------------------------------------------------------------------------
# Wrapper
# --------------------------------------------------------------------------
def _tpu_limits():
    """Generation-aware VMEM limit + softmax compute dtype."""
    try:
        cap = int(pltpu.get_tpu_info().vmem_capacity_bytes)
    except Exception:
        cap = 128 * 1024 * 1024
    # ~48 MiB on v7x (64 MiB VMEM), 96 MiB on v5e / v6e (128 MiB VMEM).
    vmem_limit = max(32 * 1024 * 1024, min(96 * 1024 * 1024, (cap * 3) // 4))
    try:
        kind = jax.devices()[0].device_kind.lower()
    except Exception:
        kind = ""
    older = (kind == "") or any(t in kind for t in ("v2", "v3", "v4", "v5"))
    softmax_dtype = jnp.float32 if older else jnp.bfloat16   # no bf16 EUP pre-v6e
    return vmem_limit, softmax_dtype


def transformer_self_attention(x, mask, params, *, num_heads):
    B, T, D = x.shape
    H = num_heads
    assert D % H == 0
    dh = D // H
    F = params["w_emb"].shape[1]
    S = params["w_cls"].shape[1]
    vmem_limit, softmax_dtype = _tpu_limits()

    # ---- one-time head-major / bf16 weight prep (outside the kernels) ----
    wqkv = params["w_qkv"]                              # (D, 3D) = [Wq | Wk | Wv]
    bqkv = params["b_qkv"]                              # (1, 3D)
    wq = wqkv[:, 0 * D:1 * D].reshape(D, H, dh)
    wk = wqkv[:, 1 * D:2 * D].reshape(D, H, dh)
    wv = wqkv[:, 2 * D:3 * D].reshape(D, H, dh)
    # fused per-head QKV weight: (H, D, 3*dh) -> one lane-dense matmul per head
    w_qkv_h = jnp.concatenate([wq, wk, wv], axis=-1).transpose(1, 0, 2)
    w_qkv_h = w_qkv_h.astype(jnp.bfloat16)
    bq = bqkv[:, 0 * D:1 * D].reshape(1, H, dh)
    bk = bqkv[:, 1 * D:2 * D].reshape(1, H, dh)
    bv = bqkv[:, 2 * D:3 * D].reshape(1, H, dh)
    b_qkv_h = jnp.concatenate([bq, bk, bv], axis=-1).transpose(1, 0, 2)
    b_qkv_h = b_qkv_h.astype(jnp.float32)               # (H, 1, 3*dh)
    wo = params["w_o"].reshape(H, dh, D).astype(jnp.bfloat16)   # rows head-major
    bo = params["b_o"].astype(jnp.float32)                      # (1, D)
    wp = params["w_pool"].T.astype(jnp.float32)                 # (1, D)
    bp = params["b_pool"].astype(jnp.float32)                   # (1, 1)

    # ---- pad T to the bf16 sublane pack (16) so in-kernel reshapes stay tiled ----
    T_pad = ((T + 15) // 16) * 16
    mask_scores = T_pad != T       # only needed to hide the padded key columns

    # ---- batch tiling: dense (Bb, D) outputs; VMEM / generation aware ----
    # TODO(synk): for B <= 8 there is a single batch block, so one v7x TensorCore
    #             idles; splitting would force Bpad = 16 (sublane rule for the
    #             (Bb, D) outputs) and is a net loss at these sizes.
    if B <= 8:
        Bb = B
    else:
        ws16 = 16 * T_pad * (T_pad + 3 * D) * 4          # rough per-block f32 bytes
        Bb = 16 if (B >= 32 and B % 16 == 0 and ws16 <= vmem_limit // 4) else 8
    Bpad = ((B + Bb - 1) // Bb) * Bb
    nb = Bpad // Bb

    xb = x
    mb = mask.astype(jnp.float32)
    if (Bpad, T_pad) != (B, T):
        xb = jnp.zeros((Bpad, T_pad, D), x.dtype).at[:B, :T].set(x)
        mb = jnp.zeros((Bpad, T_pad), jnp.float32).at[:B, :T].set(
            mask.astype(jnp.float32))

    const = dict(pipeline_mode=pl.Buffered(1))   # constant blocks: no double-buffer
    mean, std = pl.pallas_call(
        partial(_attn_pool_kernel, num_heads=H, head_dim=dh,
                mask_scores=mask_scores, softmax_dtype=softmax_dtype),
        out_shape=(jax.ShapeDtypeStruct((Bpad, D), jnp.float32),
                   jax.ShapeDtypeStruct((Bpad, D), jnp.float32)),
        grid=(nb,),
        in_specs=[
            pl.BlockSpec((Bb, T_pad, D), lambda b: (b, 0, 0)),            # x (bf16)
            pl.BlockSpec((Bb, T_pad), lambda b: (b, 0)),                  # mask
            pl.BlockSpec((H, D, 3 * dh), lambda b: (0, 0, 0), **const),   # W_qkv
            pl.BlockSpec((H, 1, 3 * dh), lambda b: (0, 0, 0), **const),   # b_qkv
            pl.BlockSpec((H, dh, D), lambda b: (0, 0, 0), **const),       # W_o
            pl.BlockSpec((1, D), lambda b: (0, 0), **const),              # b_o
            pl.BlockSpec((1, D), lambda b: (0, 0), **const),              # w_pool
            pl.BlockSpec((1, 1), lambda b: (0, 0), **const),              # b_pool
        ],
        out_specs=(pl.BlockSpec((Bb, D), lambda b: (b, 0)),
                   pl.BlockSpec((Bb, D), lambda b: (b, 0))),
        compiler_params=pltpu.CompilerParams(
            dimension_semantics=("parallel",),
            vmem_limit_bytes=vmem_limit),
    )(xb.astype(jnp.bfloat16), mb, w_qkv_h, b_qkv_h, wo, bo, wp, bp)
    if Bpad != B:
        mean, std = mean[:B], std[:B]

    # ---- head: emb Linear -> BN (batch stats) -> ReLU -> classifier ----
    # concat([mean, std]) is folded into a split emb weight (no lane concat).
    wem = params["w_emb"][:D].astype(jnp.bfloat16)      # (D, F) acts on mean
    wes = params["w_emb"][D:].astype(jnp.bfloat16)      # (D, F) acts on std
    be = params["b_emb"].astype(jnp.float32)
    gamma = params["bn_gamma"].astype(jnp.float32)
    beta = params["bn_beta"].astype(jnp.float32)
    S_pad = ((S + 127) // 128) * 128                    # lane-dense logits store
    wc = jnp.zeros((F, S_pad), jnp.bfloat16).at[:, :S].set(
        params["w_cls"].astype(jnp.bfloat16))
    bc = jnp.zeros((1, S_pad), jnp.float32).at[:, :S].set(
        params["b_cls"].astype(jnp.float32))

    # Single grid step (TF = F) whenever the weights fit the VMEM budget:
    # kernel 2 is launch/DMA bound (M = B), not MXU bound.
    def _k2_vmem(tf):
        return (2 * (2 * D * tf * 2)        # two W_emb halves, bf16, double-buffered
                + 2 * tf * S_pad * 2        # W_cls, bf16, double-buffered
                + 2 * 3 * tf * 4            # b_emb / gamma / beta
                + 2 * B * D * 2             # mean / std (single-buffered)
                + B * S_pad * 4             # resident logits accumulator
                + 2 * B * tf * 4            # emb output
                + (1 << 20))                # slack
    cands = [F] + [c for c in (2048, 1024, 512, 256, 128) if c < F and F % c == 0]
    TF = cands[-1]
    for cand in cands:
        if _k2_vmem(cand) <= int(vmem_limit * 0.6):
            TF = cand
            break
    # TODO(synk): when nb == 1 this could be fused into kernel 1's epilogue to
    #             drop the second launch + the mean/std HBM round trip.

    logits_p, emb = pl.pallas_call(
        _head_kernel,
        out_shape=(jax.ShapeDtypeStruct((B, S_pad), jnp.float32),
                   jax.ShapeDtypeStruct((B, F), jnp.float32)),
        grid=(F // TF,),
        in_specs=[
            pl.BlockSpec((B, D), lambda f: (0, 0), **const),     # mean (bf16)
            pl.BlockSpec((B, D), lambda f: (0, 0), **const),     # std  (bf16)
            pl.BlockSpec((D, TF), lambda f: (0, f)),             # W_emb (mean half)
            pl.BlockSpec((D, TF), lambda f: (0, f)),             # W_emb (std half)
            pl.BlockSpec((1, TF), lambda f: (0, f)),             # b_emb
            pl.BlockSpec((1, TF), lambda f: (0, f)),             # bn gamma
            pl.BlockSpec((1, TF), lambda f: (0, f)),             # bn beta
            pl.BlockSpec((TF, S_pad), lambda f: (f, 0)),         # W_cls (padded)
            pl.BlockSpec((1, S_pad), lambda f: (0, 0), **const), # b_cls (padded)
        ],
        out_specs=(pl.BlockSpec((B, S_pad), lambda f: (0, 0)),   # resident acc
                   pl.BlockSpec((B, TF), lambda f: (0, f))),
        compiler_params=pltpu.CompilerParams(
            dimension_semantics=("arbitrary",),   # F axis carries the reduction
            vmem_limit_bytes=vmem_limit),
    )(mean.astype(jnp.bfloat16), std.astype(jnp.bfloat16),
      wem, wes, be, gamma, beta, wc, bc)
    return logits_p[:, :S], emb


def init_params(key, input_dim, num_heads, dim_feedforward, n_spks):
    del num_heads
    D = input_dim
    F = dim_feedforward * 8
    ks = jax.random.split(key, 6)
    s = 0.05
    return {
        "w_qkv": s * jax.random.normal(ks[0], (D, 3 * D), jnp.float32),
        "b_qkv": jnp.zeros((1, 3 * D), jnp.float32),
        "w_o": s * jax.random.normal(ks[1], (D, D), jnp.float32),
        "b_o": jnp.zeros((1, D), jnp.float32),
        "w_pool": s * jax.random.normal(ks[2], (D, 1), jnp.float32),
        "b_pool": jnp.zeros((1, 1), jnp.float32),
        "w_emb": s * jax.random.normal(ks[3], (2 * D, F), jnp.float32),
        "b_emb": s * jax.random.normal(ks[4], (1, F), jnp.float32),
        "bn_gamma": jnp.ones((1, F), jnp.float32),
        "bn_beta": jnp.zeros((1, F), jnp.float32),
        "w_cls": s * jax.random.normal(ks[5], (F, n_spks), jnp.float32),
        "b_cls": jnp.zeros((1, n_spks), jnp.float32),
    }


if __name__ == "__main__":
    B, T = 2, 8
    input_dim, num_heads, dim_feedforward, n_spks = 32, 4, 16, 10

    key = jax.random.PRNGKey(0)
    k_x, k_p = jax.random.split(key)
    x = jax.random.normal(k_x, (B, T, input_dim), jnp.float32)
    mask = jnp.ones((B, T), jnp.float32)     # mask=None in reference -> all valid
    params = init_params(k_p, input_dim, num_heads, dim_feedforward, n_spks)

    logits, emb = transformer_self_attention(x, mask, params, num_heads=num_heads)
    jax.block_until_ready((logits, emb))
    assert logits.shape == (B, n_spks) and emb.shape == (B, dim_feedforward * 8)
    assert bool(jnp.all(jnp.isfinite(logits))) and bool(jnp.all(jnp.isfinite(emb)))
    print("KERNEL_OK")
</pallas_src>

<mosaic_0001>
module attributes {stable_mosaic.version = 11 : i64} {
  func.func @_attn_pool_kernel(%arg0: i32, %arg1: memref<2x16x32xbf16, #tpu.memory_space<vmem>>, %arg2: memref<2x16xf32, #tpu.memory_space<vmem>>, %arg3: memref<4x32x24xbf16, #tpu.memory_space<vmem>>, %arg4: memref<4x1x24xf32, #tpu.memory_space<vmem>>, %arg5: memref<4x8x32xbf16, #tpu.memory_space<vmem>>, %arg6: memref<1x32xf32, #tpu.memory_space<vmem>>, %arg7: memref<1x32xf32, #tpu.memory_space<vmem>>, %arg8: memref<1x1xf32, #tpu.memory_space<vmem>>, %arg9: memref<2x32xf32, #tpu.memory_space<vmem>>, %arg10: memref<2x32xf32, #tpu.memory_space<vmem>>) attributes {dimension_semantics = [#tpu.dimension_semantics<parallel>], iteration_bounds = array<i64: 1>, scalar_prefetch = 0 : i64, scratch_operands = 0 : i64, tpu.core_type = #tpu.core_type<tc>, window_params = [{transform_indices = @transform_0, window_bounds = array<i64: 2, 16, 32>}, {transform_indices = @transform_1, window_bounds = array<i64: 2, 16>}, {pipeline_mode = #tpu.pipeline_mode<synchronous>, transform_indices = @transform_2, window_bounds = array<i64: 4, 32, 24>}, {pipeline_mode = #tpu.pipeline_mode<synchronous>, transform_indices = @transform_3, window_bounds = array<i64: 4, 1, 24>}, {pipeline_mode = #tpu.pipeline_mode<synchronous>, transform_indices = @transform_4, window_bounds = array<i64: 4, 8, 32>}, {pipeline_mode = #tpu.pipeline_mode<synchronous>, transform_indices = @transform_5, window_bounds = array<i64: 1, 32>}, {pipeline_mode = #tpu.pipeline_mode<synchronous>, transform_indices = @transform_6, window_bounds = array<i64: 1, 32>}, {pipeline_mode = #tpu.pipeline_mode<synchronous>, transform_indices = @transform_7, window_bounds = array<i64: 1, 1>}, {transform_indices = @transform_8, window_bounds = array<i64: 2, 32>}, {transform_indices = @transform_9, window_bounds = array<i64: 2, 32>}]} {
    %c0 = arith.constant 0 : index
    %c0_0 = arith.constant 0 : index
    %c0_1 = arith.constant 0 : index
    %0 = vector.load %arg1[%c0, %c0_0, %c0_1] : memref<2x16x32xbf16, #tpu.memory_space<vmem>>, vector<2x16x32xbf16>
    %1 = vector.shape_cast %0 : vector<2x16x32xbf16> to vector<32x32xbf16>
    %c0_2 = arith.constant 0 : index
    %c0_3 = arith.constant 0 : index
    %2 = vector.load %arg2[%c0_2, %c0_3] : memref<2x16xf32, #tpu.memory_space<vmem>>, vector<2x16xf32>
    %cst = arith.constant 0.000000e+00 : f32
    %3 = vector.broadcast %cst : f32 to vector<32x32xf32>
    %c0_i32 = arith.constant 0 : i32
    %c4_i32 = arith.constant 4 : i32
    %4 = arith.addi %c0_i32, %c4_i32 : i32
    %c1_i32 = arith.constant 1 : i32
    %5 = scf.for %arg11 = %c0_i32 to %4 step %c1_i32 iter_args(%arg12 = %3) -> (vector<32x32xf32>)  : i32 {
      %48 = arith.index_cast %arg11 : i32 to index
      %c0_23 = arith.constant 0 : index
      %c0_24 = arith.constant 0 : index
      %49 = vector.load %arg3[%48, %c0_23, %c0_24] : memref<4x32x24xbf16, #tpu.memory_space<vmem>>, vector<1x32x24xbf16>
      %50 = vector.shape_cast %49 : vector<1x32x24xbf16> to vector<32x24xbf16>
      %cst_25 = arith.constant dense<0.000000e+00> : vector<32x24xf32>
      %51 = tpu.matmul %1, %50, %cst_25 {dimension_numbers = #tpu.dot_dimension_numbers<[1], [0], [0], [1], [0, 0, 1, 1], [], []>} : vector<32x32xbf16>, vector<32x24xbf16>, vector<32x24xf32> -> vector<32x24xf32>
      %52 = arith.index_cast %arg11 : i32 to index
      %c0_26 = arith.constant 0 : index
      %c0_27 = arith.constant 0 : index
      %53 = vector.load %arg4[%52, %c0_26, %c0_27] : memref<4x1x24xf32, #tpu.memory_space<vmem>>, vector<1x1x24xf32>
      %54 = vector.shape_cast %53 : vector<1x1x24xf32> to vector<1x24xf32>
      %55 = vector.broadcast %54 : vector<1x24xf32> to vector<32x24xf32>
      %56 = arith.addf %51, %55 : vector<32x24xf32>
      %57 = arith.truncf %56 : vector<32x24xf32> to vector<32x24xbf16>
      %58 = vector.shape_cast %57 : vector<32x24xbf16> to vector<2x16x24xbf16>
      %59 = vector.extract_strided_slice %58 {offsets = [0, 0, 0], sizes = [2, 16, 8], strides = [1, 1, 1]} : vector<2x16x24xbf16> to vector<2x16x8xbf16>
      %60 = vector.extract_strided_slice %58 {offsets = [0, 0, 8], sizes = [2, 16, 8], strides = [1, 1, 1]} : vector<2x16x24xbf16> to vector<2x16x8xbf16>
      %61 = vector.extract_strided_slice %58 {offsets = [0, 0, 16], sizes = [2, 16, 8], strides = [1, 1, 1]} : vector<2x16x24xbf16> to vector<2x16x8xbf16>
      "tpu.trace_start"() <{level = 10 : i32, message = "bte,bse->bts"}> : () -> ()
      %cst_28 = arith.constant dense<0.000000e+00> : vector<2x16x16xf32>
      %62 = tpu.matmul %59, %60, %cst_28 {dimension_numbers = #tpu.dot_dimension_numbers<[2], [2], [1], [1], [0, 0, 0, 1, 1, 1], [0], [0]>} : vector<2x16x8xbf16>, vector<2x16x8xbf16>, vector<2x16x16xf32> -> vector<2x16x16xf32>
      "tpu.trace_stop"() : () -> ()
      %cst_29 = arith.constant 0.353553385 : f32
      %63 = vector.broadcast %cst_29 : f32 to vector<2x16x16xf32>
      %64 = arith.mulf %62, %63 : vector<2x16x16xf32>
      %65 = vector.shape_cast %2 : vector<2x16xf32> to vector<2x1x16xf32>
      %cst_30 = arith.constant 0.000000e+00 : f32
      %66 = vector.broadcast %cst_30 : f32 to vector<2x1x16xf32>
      %67 = arith.cmpf ogt, %65, %66 : vector<2x1x16xf32>
      %cst_31 = arith.constant -1.000000e+30 : f32
      %68 = vector.shape_cast %67 : vector<2x1x16xi1> to vector<2x1x16xi1>
      %69 = vector.broadcast %68 : vector<2x1x16xi1> to vector<2x16x16xi1>
      %70 = vector.broadcast %cst_31 : f32 to vector<2x16x16xf32>
      %71 = arith.select %69, %64, %70 : vector<2x16x16xi1>, vector<2x16x16xf32>
      %cst_32 = arith.constant dense<0xFF800000> : vector<2x16xf32>
      %72 = vector.multi_reduction <maximumf>, %71, %cst_32 [2] : vector<2x16x16xf32> to vector<2x16xf32>
      %73 = vector.shape_cast %72 : vector<2x16xf32> to vector<2x16x1xf32>
      %74 = vector.broadcast %73 : vector<2x16x1xf32> to vector<2x16x16xf32>
      %75 = arith.subf %71, %74 : vector<2x16x16xf32>
      %76 = arith.truncf %75 : vector<2x16x16xf32> to vector<2x16x16xbf16>
      %77 = math.exp %76 : vector<2x16x16xbf16>
      %78 = arith.extf %77 : vector<2x16x16xbf16> to vector<2x16x16xf32>
      %cst_33 = arith.constant dense<0.000000e+00> : vector<2x16xf32>
      %79 = vector.multi_reduction <add>, %78, %cst_33 [2] : vector<2x16x16xf32> to vector<2x16xf32>
      %80 = vector.shape_cast %79 : vector<2x16xf32> to vector<2x16x1xf32>
      "tpu.trace_start"() <{level = 10 : i32, message = "bts,bse->bte"}> : () -> ()
      %cst_34 = arith.constant dense<0.000000e+00> : vector<2x16x8xf32>
      %81 = tpu.matmul %77, %61, %cst_34 {dimension_numbers = #tpu.dot_dimension_numbers<[2], [1], [1], [2], [0, 0, 0, 1, 1, 2], [0], [0]>} : vector<2x16x16xbf16>, vector<2x16x8xbf16>, vector<2x16x8xf32> -> vector<2x16x8xf32>
      "tpu.trace_stop"() : () -> ()
      %82 = tpu.reciprocal %80 {approx = true} : vector<2x16x1xf32> -> vector<2x16x1xf32>
      %83 = vector.broadcast %82 : vector<2x16x1xf32> to vector<2x16x8xf32>
      %84 = arith.mulf %81, %83 : vector<2x16x8xf32>
      %85 = arith.truncf %84 : vector<2x16x8xf32> to vector<2x16x8xbf16>
      %86 = vector.shape_cast %85 : vector<2x16x8xbf16> to vector<32x8xbf16>
      %87 = arith.index_cast %arg11 : i32 to index
      %c0_35 = arith.constant 0 : index
      %c0_36 = arith.constant 0 : index
      %88 = vector.load %arg5[%87, %c0_35, %c0_36] : memref<4x8x32xbf16, #tpu.memory_space<vmem>>, vector<1x8x32xbf16>
      %89 = vector.shape_cast %88 : vector<1x8x32xbf16> to vector<8x32xbf16>
      %cst_37 = arith.constant dense<0.000000e+00> : vector<32x32xf32>
      %90 = tpu.matmul %86, %89, %cst_37 {dimension_numbers = #tpu.dot_dimension_numbers<[1], [0], [0], [1], [0, 0, 1, 1], [], []>} : vector<32x8xbf16>, vector<8x32xbf16>, vector<32x32xf32> -> vector<32x32xf32>
      %91 = arith.addf %arg12, %90 : vector<32x32xf32>
      scf.yield %91 : vector<32x32xf32>
    }
    %c4_i32_4 = arith.constant 4 : i32
    %c0_5 = arith.constant 0 : index
    %c0_6 = arith.constant 0 : index
    %6 = vector.load %arg6[%c0_5, %c0_6] : memref<1x32xf32, #tpu.memory_space<vmem>>, vector<1x32xf32>
    %7 = vector.broadcast %6 : vector<1x32xf32> to vector<32x32xf32>
    %8 = arith.addf %5, %7 : vector<32x32xf32>
    %9 = arith.truncf %8 : vector<32x32xf32> to vector<32x32xbf16>
    %10 = vector.shape_cast %9 : vector<32x32xbf16> to vector<2x16x32xbf16>
    %c0_7 = arith.constant 0 : index
    %c0_8 = arith.constant 0 : index
    %11 = vector.load %arg7[%c0_7, %c0_8] : memref<1x32xf32, #tpu.memory_space<vmem>>, vector<1x32xf32>
    %12 = arith.extf %10 : vector<2x16x32xbf16> to vector<2x16x32xf32>
    %13 = vector.shape_cast %11 : vector<1x32xf32> to vector<1x1x32xf32>
    %14 = vector.broadcast %13 : vector<1x1x32xf32> to vector<2x16x32xf32>
    %15 = arith.mulf %12, %14 : vector<2x16x32xf32>
    %cst_9 = arith.constant dense<0.000000e+00> : vector<2x16xf32>
    %16 = vector.multi_reduction <add>, %15, %cst_9 [2] : vector<2x16x32xf32> to vector<2x16xf32>
    %c0_10 = arith.constant 0 : index
    %c0_11 = arith.constant 0 : index
    %17 = vector.load %arg8[%c0_10, %c0_11] : memref<1x1xf32, #tpu.memory_space<vmem>>, vector<1x1xf32>
    %18 = vector.broadcast %17 : vector<1x1xf32> to vector<2x16xf32>
    %19 = arith.addf %16, %18 : vector<2x16xf32>
    %cst_12 = arith.constant 0.000000e+00 : f32
    %20 = vector.broadcast %cst_12 : f32 to vector<2x16xf32>
    %21 = arith.cmpf ogt, %2, %20 : vector<2x16xf32>
    %cst_13 = arith.constant -1.000000e+30 : f32
    %22 = vector.broadcast %cst_13 : f32 to vector<2x16xf32>
    %23 = arith.select %21, %19, %22 : vector<2x16xi1>, vector<2x16xf32>
    %cst_14 = arith.constant dense<0xFF800000> : vector<2xf32>
    %24 = vector.multi_reduction <maximumf>, %23, %cst_14 [1] : vector<2x16xf32> to vector<2xf32>
    %25 = vector.shape_cast %24 : vector<2xf32> to vector<2x1xf32>
    %26 = vector.broadcast %25 : vector<2x1xf32> to vector<2x16xf32>
    %27 = arith.subf %23, %26 : vector<2x16xf32>
    %28 = math.exp %27 : vector<2x16xf32>
    %cst_15 = arith.constant dense<0.000000e+00> : vector<2xf32>
    %29 = vector.multi_reduction <add>, %28, %cst_15 [1] : vector<2x16xf32> to vector<2xf32>
    %30 = vector.shape_cast %29 : vector<2xf32> to vector<2x1xf32>
    %31 = tpu.reciprocal %30 {approx = true} : vector<2x1xf32> -> vector<2x1xf32>
    %32 = vector.broadcast %31 : vector<2x1xf32> to vector<2x16xf32>
    %33 = arith.mulf %28, %32 : vector<2x16xf32>
    %34 = arith.truncf %33 : vector<2x16xf32> to vector<2x16xbf16>
    %35 = vector.shape_cast %34 : vector<2x16xbf16> to vector<2x1x16xbf16>
    "tpu.trace_start"() <{level = 10 : i32, message = "bqt,btd->bqd"}> : () -> ()
    %cst_16 = arith.constant dense<0.000000e+00> : vector<2x1x32xf32>
    %36 = tpu.matmul %35, %10, %cst_16 {dimension_numbers = #tpu.dot_dimension_numbers<[2], [1], [1], [2], [0, 0, 0, 1, 1, 2], [0], [0]>} : vector<2x1x16xbf16>, vector<2x16x32xbf16>, vector<2x1x32xf32> -> vector<2x1x32xf32>
    "tpu.trace_stop"() : () -> ()
    %37 = vector.shape_cast %36 : vector<2x1x32xf32> to vector<2x32xf32>
    %38 = arith.mulf %10, %10 : vector<2x16x32xbf16>
    "tpu.trace_start"() <{level = 10 : i32, message = "bqt,btd->bqd"}> : () -> ()
    %cst_17 = arith.constant dense<0.000000e+00> : vector<2x1x32xf32>
    %39 = tpu.matmul %35, %38, %cst_17 {dimension_numbers = #tpu.dot_dimension_numbers<[2], [1], [1], [2], [0, 0, 0, 1, 1, 2], [0], [0]>} : vector<2x1x16xbf16>, vector<2x16x32xbf16>, vector<2x1x32xf32> -> vector<2x1x32xf32>
    "tpu.trace_stop"() : () -> ()
    %40 = vector.shape_cast %39 : vector<2x1x32xf32> to vector<2x32xf32>
    %41 = arith.mulf %37, %37 : vector<2x32xf32>
    %42 = arith.subf %40, %41 : vector<2x32xf32>
    %cst_18 = arith.constant 9.99999971E-10 : f32
    %43 = vector.broadcast %cst_18 : f32 to vector<2x32xf32>
    %44 = arith.maximumf %42, %43 : vector<2x32xf32>
    %45 = math.sqrt %44 : vector<2x32xf32>
    %c0_19 = arith.constant 0 : index
    %c0_20 = arith.constant 0 : index
    %46 = vector.load %arg9[%c0_19, %c0_20] : memref<2x32xf32, #tpu.memory_space<vmem>>, vector<2x32xf32>
    tpu.vector_store %arg9[%c0_19, %c0_20], %37 {strides = array<i32>} : memref<2x32xf32, #tpu.memory_space<vmem>>, vector<2x32xf32>,
    %c0_21 = arith.constant 0 : index
    %c0_22 = arith.constant 0 : index
    %47 = vector.load %arg10[%c0_21, %c0_22] : memref<2x32xf32, #tpu.memory_space<vmem>>, vector<2x32xf32>
    tpu.vector_store %arg10[%c0_21, %c0_22], %45 {strides = array<i32>} : memref<2x32xf32, #tpu.memory_space<vmem>>, vector<2x32xf32>,
    return
  }
  func.func @transform_0(%arg0: i32) -> (i32, i32, i32) {
    %c0_i32 = arith.constant 0 : i32
    %c0_i32_0 = arith.constant 0 : i32
    %c0_i32_1 = arith.constant 0 : i32
    return %arg0, %c0_i32, %c0_i32_0 : i32, i32, i32
  }
  func.func @transform_1(%arg0: i32) -> (i32, i32) {
    %c0_i32 = arith.constant 0 : i32
    %c0_i32_0 = arith.constant 0 : i32
    return %arg0, %c0_i32 : i32, i32
  }
  func.func @transform_2(%arg0: i32) -> (i32, i32, i32) {
    %c0_i32 = arith.constant 0 : i32
    %c0_i32_0 = arith.constant 0 : i32
    %c0_i32_1 = arith.constant 0 : i32
    %c0_i32_2 = arith.constant 0 : i32
    return %c0_i32, %c0_i32_0, %c0_i32_1 : i32, i32, i32
  }
  func.func @transform_3(%arg0: i32) -> (i32, i32, i32) {
    %c0_i32 = arith.constant 0 : i32
    %c0_i32_0 = arith.constant 0 : i32
    %c0_i32_1 = arith.constant 0 : i32
    %c0_i32_2 = arith.constant 0 : i32
    return %c0_i32, %c0_i32_0, %c0_i32_1 : i32, i32, i32
  }
  func.func @transform_4(%arg0: i32) -> (i32, i32, i32) {
    %c0_i32 = arith.constant 0 : i32
    %c0_i32_0 = arith.constant 0 : i32
    %c0_i32_1 = arith.constant 0 : i32
    %c0_i32_2 = arith.constant 0 : i32
    return %c0_i32, %c0_i32_0, %c0_i32_1 : i32, i32, i32
  }
  func.func @transform_5(%arg0: i32) -> (i32, i32) {
    %c0_i32 = arith.constant 0 : i32
    %c0_i32_0 = arith.constant 0 : i32
    %c0_i32_1 = arith.constant 0 : i32
    return %c0_i32, %c0_i32_0 : i32, i32
  }
  func.func @transform_6(%arg0: i32) -> (i32, i32) {
    %c0_i32 = arith.constant 0 : i32
    %c0_i32_0 = arith.constant 0 : i32
    %c0_i32_1 = arith.constant 0 : i32
    return %c0_i32, %c0_i32_0 : i32, i32
  }
  func.func @transform_7(%arg0: i32) -> (i32, i32) {
    %c0_i32 = arith.constant 0 : i32
    %c0_i32_0 = arith.constant 0 : i32
    %c0_i32_1 = arith.constant 0 : i32
    return %c0_i32, %c0_i32_0 : i32, i32
  }
  func.func @transform_8(%arg0: i32) -> (i32, i32) {
    %c0_i32 = arith.constant 0 : i32
    %c0_i32_0 = arith.constant 0 : i32
    return %arg0, %c0_i32 : i32, i32
  }
  func.func @transform_9(%arg0: i32) -> (i32, i32) {
    %c0_i32 = arith.constant 0 : i32
    %c0_i32_0 = arith.constant 0 : i32
    return %arg0, %c0_i32 : i32, i32
  }
}

</mosaic_0001>

<llo_original>
// kernel: tpu_custom_call.1
$region0: #{tpu_custom_call.1}
  #allocation0 [shape = 'u32[]', space=smem, size = 0x4, offset = 0x4, fixed_abs, tag = 'smem constant byte address 0x4 - core index']
  #allocation1 [shape = 'u32[144,128]{1,0:T(1,128)}', space=vmem, size = 0x12000, scoped, tag = 'internal scratch']
  #allocation2 [shape = 'f32[1,1]{1,0:T(1,128)S(1)}', space=vmem, size = 0x200, scoped, tag = 'scoped memory for tpu_custom_call.1']
  %s0 = inlined_call_operand.vmem [shape: bf16[2,16,32], index: 0, kind: input, shape index: {}]
  %s1 = inlined_call_operand.vmem [shape: f32[2,16], index: 1, kind: input, shape index: {}]
  %s2 = inlined_call_operand.vmem [shape: bf16[4,32,24], index: 2, kind: input, shape index: {}]
  %s3 = inlined_call_operand.vmem [shape: f32[4,1,24], index: 3, kind: input, shape index: {}]
  %s4 = inlined_call_operand.vmem [shape: bf16[4,8,32], index: 4, kind: input, shape index: {}]
  %s5 = inlined_call_operand.vmem [shape: f32[1,32], index: 5, kind: input, shape index: {}]
  %s6 = inlined_call_operand.vmem [shape: f32[1,32], index: 6, kind: input, shape index: {}]
  %s7 = inlined_call_operand.<no memory space> [shape: f32[1,1], index: 7, kind: input, shape index: {}]
  %s8 = inlined_call_operand.hbm [shape: f32[2,32], index: 8, kind: output, shape index: {0}]
  %s9 = inlined_call_operand.hbm [shape: f32[2,32], index: 9, kind: output, shape index: {1}]
  %10 = xla_tuple %s8, %s9
  %s11 = sld [smem:[#allocation0]]
  $region57: #{tpu_custom_call.1} parent=0
    _
  %s13 = ssub.s32 1, %s11
  %s14 = scalar_select 0, %s13, %s11
  %v15 = vstv %s7
  %16 = vst [vmem:[#allocation2] sm:$0x1] %v15
  $region1: #{tpu_custom_call.1} parent=0
    #allocation3 [shape = 'u8[1024]{0}', space=vmem, size = 0x400, scoped, tag = 'output window, operand 0, single buffered']
    #allocation4 [shape = 's32[1]{0}', space=sflag, size = 0x4, scoped, tag = 'scoped memory for tpu_custom_call.1']
    #allocation5 [shape = 'u8[1024]{0}', space=vmem, size = 0x400, scoped, tag = 'output window, operand 1, single buffered']
    #allocation6 [shape = 's32[1]{0}', space=sflag, size = 0x4, scoped, tag = 'scoped memory for tpu_custom_call.1']
    %17 = vsyncpa [#allocation4], 0
    %18 = vsyncpa [#allocation6], 0
    // Predicated region
    $region2: #{tpu_custom_call.1} parent=1 // pred_check
      _
    $region3: #{tpu_custom_call.1} parent=1 // pred_check_branch
      %20 = sbr.rel (0) target = $region5
    $region4: #{tpu_custom_call.1} parent=1 // pred_region
      _
    $region5: #{tpu_custom_call.1} parent=1 // pred_fallthru
      _
    // Predicated region
    $region6: #{tpu_custom_call.1} parent=1 // pred_check
      _
    $region7: #{tpu_custom_call.1} parent=1 // pred_check_branch
      %22 = sbr.rel (0) target = $region9
    $region8: #{tpu_custom_call.1} parent=1 // pred_region
      _
    $region9: #{tpu_custom_call.1} parent=1 // pred_fallthru
      _
    // Predicated region
    $region10: #{tpu_custom_call.1} parent=1 // pred_check
      _
    $region11: #{tpu_custom_call.1} parent=1 // pred_check_branch
      %24 = sbr.rel (0) target = $region13
    $region12: #{tpu_custom_call.1} parent=1 // pred_region
      _
    $region13: #{tpu_custom_call.1} parent=1 // pred_fallthru
      _
    // Predicated region
    $region14: #{tpu_custom_call.1} parent=1 // pred_check
      _
    $region15: #{tpu_custom_call.1} parent=1 // pred_check_branch
      %26 = sbr.rel (0) target = $region17
    $region16: #{tpu_custom_call.1} parent=1 // pred_region
      _
    $region17: #{tpu_custom_call.1} parent=1 // pred_fallthru
      _
    // Predicated region
    $region18: #{tpu_custom_call.1} parent=1 // pred_check
      _
    $region19: #{tpu_custom_call.1} parent=1 // pred_check_branch
      %28 = sbr.rel (0) target = $region21
    $region20: #{tpu_custom_call.1} parent=1 // pred_region
      _
    $region21: #{tpu_custom_call.1} parent=1 // pred_fallthru
      _
    // Predicated region
    $region22: #{tpu_custom_call.1} parent=1 // pred_check
      _
    $region23: #{tpu_custom_call.1} parent=1 // pred_check_branch
      %30 = sbr.rel (0) target = $region25
    $region24: #{tpu_custom_call.1} parent=1 // pred_region
      _
    $region25: #{tpu_custom_call.1} parent=1 // pred_fallthru
      _
    // Predicated region
    $region26: #{tpu_custom_call.1} parent=1 // pred_check
      _
    $region27: #{tpu_custom_call.1} parent=1 // pred_check_branch
      %32 = sbr.rel (0) target = $region29
    $region28: #{tpu_custom_call.1} parent=1 // pred_region
      _
    $region29: #{tpu_custom_call.1} parent=1 // pred_fallthru
      _
    // Predicated region
    $region30: #{tpu_custom_call.1} parent=1 // pred_check
      _
    $region31: #{tpu_custom_call.1} parent=1 // pred_check_branch
      %34 = sbr.rel (0) target = $region33
    $region32: #{tpu_custom_call.1} parent=1 // pred_region
      _
    $region33: #{tpu_custom_call.1} parent=1 // pred_fallthru
      _
    %v36 = vld [vmem:[%s0] sm:$0xf]
    %v37 = vld [vmem:[%s0 + $0x4] sm:$0xf]
    %v38 = vld [vmem:[%s0 + $0x8] sm:$0xf]
    %v39 = vld [vmem:[%s0 + $0xc] sm:$0xf]
    %v40 = vld [vmem:[%s1] sm:$0x3]
    loop: start=0, step=1, limit=4
    $region34: #{tpu_custom_call.1} parent=1 // loop_pre_header
      _
    $region35: #{tpu_custom_call.1} parent=1 // loop_header
      %s42 = sphi 0, %s46
      %p43 = scmp.ge.s32.totalorder %s42, 4
      %v47 = vphi 0.0, %v501
      %v48 = vphi 0.0, %v502
      %v49 = vphi 0.0, %v503
      %v50 = vphi 0.0, %v504
    $region36: #{tpu_custom_call.1} parent=1 // loop_header_branch
      %45 = sbr.rel (%p43) target = $region40
    $region37: #{tpu_custom_call.1} parent=1 // loop_body
      %s51 = smul.u32 %s42, 4
      %s52 = smul.addr %s51, 4
      %s53 = scalar_lea.vmem %s2, %s52
      %v54 = vld [vmem:[%s53] sm:$0xf]
      %v55 = vld [vmem:[%s53 + $0x4] sm:$0xf]
      %v56 = vld [vmem:[%s53 + $0x8] sm:$0xf]
      %v57 = vld [vmem:[%s53 + $0xc] sm:$0xf]
      %s58 = scalar_lea.vmem %s3, %s42
      %v59 = vld [vmem:[%s58] sm:$0x1]
      %v61 = vlaneseq
      %v62 = vshrl.u32 %v61, 7
      %v63 = vsub.s32 0, %v62
      %v64 = vrot.slane %v59, %v63
      %v70 = vunpack.c.l.b16 %v36
      %v71 = vunpack.c.l.b16 %v37
      %v72 = vunpack.c.l.b16 %v38
      %v73 = vunpack.c.l.b16 %v39
      %v74 = vpack.c.b16 %v71, %v70
      %v75 = vpack.c.b16 %v73, %v72
      %v80 = vunpack.c.l.b16 %v54
      %v81 = vunpack.c.l.b16 %v55
      %v82 = vunpack.c.l.b16 %v56
      %v83 = vunpack.c.l.b16 %v57
      %v84 = vpack.c.b16 %v81, %v80
      %v85 = vpack.c.b16 %v83, %v82
      %vm88 = vcmask 261120
      %v90 = vsel %vm88, %v74, 0
      %v93 = vsel %vm88, %v75, 0
      %95 = vmatprep.subr.bf16.mxu0 0
      %96 = vmatpush1.bf16.msra.mxu0 0
      %97 = vmatprep.subr.bf16.mxu0 0
      %98 = vmatpush1.bf16.msra.mxu0 0
      %99 = vmatprep.subr.bf16.mxu0 0
      %100 = vmatpush1.bf16.msra.mxu0 0
      %101 = vmatprep.subr.bf16.mxu0 0
      %102 = vmatpush1.bf16.msra.mxu0 0
      %103 = vmatprep.subr.bf16.mxu0 0
      %104 = vmatpush1.bf16.msra.mxu0 0
      %105 = vmatprep.subr.bf16.mxu0 0
      %106 = vmatpush1.bf16.msra.mxu0 0
      %107 = vmatprep.subr.bf16.mxu0 0
      %108 = vmatpush1.bf16.msra.mxu0 %v85
      %109 = vmatprep.subr.bf16.mxu0 0
      %110 = vmatpush1.bf16.msra.mxu0 %v84
      %111 = vmatprep.subr.bf16.mxu0 0
      %112 = vmatpush2.bf16.msra.mxu0 0
      %113 = vmatprep.subr.bf16.mxu0 0
      %114 = vmatpush2.bf16.msra.mxu0 0
      %115 = vmatprep.subr.bf16.mxu0 0
      %116 = vmatpush2.bf16.msra.mxu0 0
      %117 = vmatprep.subr.bf16.mxu0 0
      %118 = vmatpush2.bf16.msra.mxu0 0
      %119 = vmatprep.subr.bf16.mxu0 0
      %120 = vmatpush2.bf16.msra.mxu0 0
      %121 = vmatprep.subr.bf16.mxu0 0
      %122 = vmatpush2.bf16.msra.mxu0 0
      %123 = vmatprep.subr.bf16.mxu0 0
      %124 = vmatpush2.bf16.msra.mxu0 0
      %125 = vmatprep.subr.bf16.mxu0 0
      %126 = vmatpush2.bf16.msra.mxu0 0
      %127 = vmatprep.mubr.bf16.mxu0 0
      %128 = vmatmul.mubr.bf16.gmra.mxu0 %v90
      %v129 = vpop.f32.mrf.mxu0
      %v130 = vadd.f32 %v64, %v129
      %v131 = vpop.f32.mrf.mxu0
      %v132 = vpop.f32.mrf.mxu0
      %v133 = vadd.f32 %v64, %v132
      %v134 = vpop.f32.mrf.mxu0
      %135 = vmatprep.mubr.bf16.mxu0 0
      %136 = vmatmul.mubr.bf16.gmra.mxu0 %v93
      %v137 = vpop.f32.mrf.mxu0
      %v138 = vadd.f32 %v64, %v137
      %v139 = vpop.f32.mrf.mxu0
      %v140 = vpop.f32.mrf.mxu0
      %v141 = vadd.f32 %v64, %v140
      %v142 = vpop.f32.mrf.mxu0
      %143 = vdwg.mxu0
      %v144 = vpack.c.bf16 %v133, %v130
      %v145 = vpack.c.bf16 %v141, %v138
      %147 = vrot.lane.b32.xlu0 %v144, 120
      %v148 = vpop.permute.xlu0 %147
      %vm149 = vcmask 64512
      %v151 = vsel %vm149, %v144, 0
      %v154 = vsel %vm149, %v148, 0
      %156 = vmatprep.subr.bf16.mxu0 0
      %157 = vmatpush1.bf16.xpose.msra.mxu0 0
      %158 = vmatprep.subr.bf16.mxu0 0
      %159 = vmatpush1.bf16.xpose.msra.mxu0 0
      %160 = vmatprep.subr.bf16.mxu0 0
      %161 = vmatpush1.bf16.xpose.msra.mxu0 0
      %162 = vmatprep.subr.bf16.mxu0 0
      %163 = vmatpush1.bf16.xpose.msra.mxu0 0
      %164 = vmatprep.subr.bf16.mxu0 0
      %165 = vmatpush1.bf16.xpose.msra.mxu0 0
      %166 = vmatprep.subr.bf16.mxu0 0
      %167 = vmatpush1.bf16.xpose.msra.mxu0 0
      %168 = vmatprep.subr.bf16.mxu0 0
      %169 = vmatpush1.bf16.xpose.msra.mxu0 0
      %170 = vmatprep.subr.bf16.mxu0 0
      %171 = vmatpush1.bf16.xpose.msra.mxu0 %v154
      %172 = vmatprep.subr.bf16.mxu0 0
      %173 = vmatpush2.bf16.xpose.msra.mxu0 0
      %174 = vmatprep.subr.bf16.mxu0 0
      %175 = vmatpush2.bf16.xpose.msra.mxu0 0
      %176 = vmatprep.subr.bf16.mxu0 0
      %177 = vmatpush2.bf16.xpose.msra.mxu0 0
      %178 = vmatprep.subr.bf16.mxu0 0
      %179 = vmatpush2.bf16.xpose.msra.mxu0 0
      %180 = vmatprep.subr.bf16.mxu0 0
      %181 = vmatpush2.bf16.xpose.msra.mxu0 0
      %182 = vmatprep.subr.bf16.mxu0 0
      %183 = vmatpush2.bf16.xpose.msra.mxu0 0
      %184 = vmatprep.subr.bf16.mxu0 0
      %185 = vmatpush2.bf16.xpose.msra.mxu0 0
      %186 = vmatprep.subr.bf16.mxu0 0
      %187 = vmatpush2.bf16.xpose.msra.mxu0 0
      %188 = vmatprep.mubr.bf16.mxu0 0
      %189 = vmatmul.mubr.bf16.gmra.mxu0 %v151
      %v190 = vpop.f32.mrf.mxu0
      %v191 = vadd.f32 0.0, %v190
      %v192 = vpop.f32.mrf.mxu0
      %v193 = vpop.f32.mrf.mxu0
      %v194 = vadd.f32 0.0, %v193
      %v195 = vpop.f32.mrf.mxu0
      %196 = vdwg.mxu0
      %198 = vrot.lane.b32.xlu0 %v145, 120
      %v199 = vpop.permute.xlu0 %198
      %v201 = vsel %vm149, %v145, 0
      %v204 = vsel %vm149, %v199, 0
      %206 = vmatprep.subr.bf16.mxu0 0
      %207 = vmatpush1.bf16.xpose.msra.mxu0 0
      %208 = vmatprep.subr.bf16.mxu0 0
      %209 = vmatpush1.bf16.xpose.msra.mxu0 0
      %210 = vmatprep.subr.bf16.mxu0 0
      %211 = vmatpush1.bf16.xpose.msra.mxu0 0
      %212 = vmatprep.subr.bf16.mxu0 0
      %213 = vmatpush1.bf16.xpose.msra.mxu0 0
      %214 = vmatprep.subr.bf16.mxu0 0
      %215 = vmatpush1.bf16.xpose.msra.mxu0 0
      %216 = vmatprep.subr.bf16.mxu0 0
      %217 = vmatpush1.bf16.xpose.msra.mxu0 0
      %218 = vmatprep.subr.bf16.mxu0 0
      %219 = vmatpush1.bf16.xpose.msra.mxu0 0
      %220 = vmatprep.subr.bf16.mxu0 0
      %221 = vmatpush1.bf16.xpose.msra.mxu0 %v204
      %222 = vmatprep.subr.bf16.mxu0 0
      %223 = vmatpush2.bf16.xpose.msra.mxu0 0
      %224 = vmatprep.subr.bf16.mxu0 0
      %225 = vmatpush2.bf16.xpose.msra.mxu0 0
      %226 = vmatprep.subr.bf16.mxu0 0
      %227 = vmatpush2.bf16.xpose.msra.mxu0 0
      %228 = vmatprep.subr.bf16.mxu0 0
      %229 = vmatpush2.bf16.xpose.msra.mxu0 0
      %230 = vmatprep.subr.bf16.mxu0 0
      %231 = vmatpush2.bf16.xpose.msra.mxu0 0
      %232 = vmatprep.subr.bf16.mxu0 0
      %233 = vmatpush2.bf16.xpose.msra.mxu0 0
      %234 = vmatprep.subr.bf16.mxu0 0
      %235 = vmatpush2.bf16.xpose.msra.mxu0 0
      %236 = vmatprep.subr.bf16.mxu0 0
      %237 = vmatpush2.bf16.xpose.msra.mxu0 0
      %238 = vmatprep.mubr.bf16.mxu0 0
      %239 = vmatmul.mubr.bf16.gmra.mxu0 %v201
      %v240 = vpop.f32.mrf.mxu0
      %v241 = vadd.f32 0.0, %v240
      %v242 = vpop.f32.mrf.mxu0
      %v243 = vpop.f32.mrf.mxu0
      %v244 = vadd.f32 0.0, %v243
      %v245 = vpop.f32.mrf.mxu0
      %246 = vdwg.mxu0
      %v247 = vmul.f32 %v191, 0.35355338
      %v248 = vmul.f32 %v194, 0.35355338
      %v249 = vmul.f32 %v241, 0.35355338
      %v250 = vmul.f32 %v244, 0.35355338
      %v253 = vunpack.c.l.s4 1966171168
      %v254 = vunpack.c.0.s8 %v253
      %v255 = vlaneseq
      %v256 = vshrl.u32 %v255, 7
      %v257 = vsub.s32 %v254, %v256
      %v258 = vrot.slane %v40, %v257
      %v259 = vcombine.high %v258, %v258
      %v261 = vunpack.c.l.s4 1966171168
      %v262 = vunpack.c.0.s8 %v261
      %v263 = vlaneseq
      %v264 = vshrl.u32 %v263, 7
      %v265 = vsub.s32 %v262, %v264
      %v266 = vrot.slane %v258, %v265
      %v268 = vunpack.c.l.s4 1966171168
      %v269 = vunpack.c.0.s8 %v268
      %v270 = vlaneseq
      %v271 = vshrl.u32 %v270, 7
      %v272 = vsub.s32 %v269, %v271
      %v273 = vrot.slane %v259, %v272
      %vm276 = vcmp.gt.f32.partialorder %v266, 0.0
      %vm277 = vcmp.gt.f32.partialorder %v273, 0.0
      %v278 = vsel %vm276, 1, 0
      %v279 = vsel %vm277, 1, 0
      %v280 = vlaneseq
      %v281 = vshrl.u32 %v280, 7
      %v282 = vsub.s32 0, %v281
      %v283 = vrot.slane %v278, %v282
      %v284 = vlaneseq
      %v285 = vshrl.u32 %v284, 7
      %v286 = vsub.s32 0, %v285
      %v287 = vrot.slane %v279, %v286
      %vm288 = vcmp.eq.s32.totalorder %v283, 1
      %vm289 = vcmp.eq.s32.totalorder %v287, 1
      %v290 = vsel %vm288, %v247, -1e+30
      %v291 = vsel %vm288, %v248, -1e+30
      %v292 = vsel %vm289, %v249, -1e+30
      %v293 = vsel %vm289, %v250, -1e+30
      %vm294 = vcmask 130048
      %v295 = vsel %vm294, %v290, -inf
      %296 = vmax.xlane.f32.xlu0 %v295
      %v297 = vpop.xlane.xlu0 %296
      %v298 = vsel %vm294, %v291, -inf
      %299 = vmax.xlane.f32.xlu0 %v298
      %v300 = vpop.xlane.xlu0 %299
      %v301 = vsel %vm294, %v292, -inf
      %302 = vmax.xlane.f32.xlu0 %v301
      %v303 = vpop.xlane.xlu0 %302
      %v304 = vsel %vm294, %v293, -inf
      %305 = vmax.xlane.f32.xlu0 %v304
      %v306 = vpop.xlane.xlu0 %305
      %v307 = vsub.f32 %v290, %v297
      %v308 = vsub.f32 %v291, %v300
      %v309 = vsub.f32 %v292, %v303
      %v310 = vsub.f32 %v293, %v306
      %v311 = vpack.c.bf16 %v308, %v307
      %v312 = vpack.c.bf16 %v310, %v309
      %v314 = vmul.bf16 %v311, 1069105081
      %v315 = vpow.bf16.pop %v314
      %v317 = vmul.bf16 %v312, 1069105081
      %v318 = vpow.bf16.pop %v317
      %v319 = vunpack.c.l.bf16 %v315
      %v320 = vunpack.c.h.bf16 %v315
      %v321 = vunpack.c.l.bf16 %v318
      %v322 = vunpack.c.h.bf16 %v318
      %v323 = vsel %vm294, %v319, 0.0
      %324 = vadd.xlane.f32.xlu0 %v323
      %v325 = vpop.xlane.xlu0 %324
      %v326 = vsel %vm294, %v320, 0.0
      %327 = vadd.xlane.f32.xlu0 %v326
      %v328 = vpop.xlane.xlu0 %327
      %v329 = vsel %vm294, %v321, 0.0
      %330 = vadd.xlane.f32.xlu0 %v329
      %v331 = vpop.xlane.xlu0 %330
      %v332 = vsel %vm294, %v322, 0.0
      %333 = vadd.xlane.f32.xlu0 %v332
      %v334 = vpop.xlane.xlu0 %333
      %335 = vrot.lane.b32.xlu0 %v144, 112
      %v336 = vpop.permute.xlu0 %335
      %v339 = vsel %vm294, %v315, 0
      %341 = vmatprep.subr.bf16.mxu0 0
      %342 = vmatpush1.bf16.msra.mxu0 0
      %343 = vmatprep.subr.bf16.mxu0 0
      %344 = vmatpush1.bf16.msra.mxu0 0
      %345 = vmatprep.subr.bf16.mxu0 0
      %346 = vmatpush1.bf16.msra.mxu0 0
      %347 = vmatprep.subr.bf16.mxu0 0
      %348 = vmatpush1.bf16.msra.mxu0 0
      %349 = vmatprep.subr.bf16.mxu0 0
      %350 = vmatpush1.bf16.msra.mxu0 0
      %351 = vmatprep.subr.bf16.mxu0 0
      %352 = vmatpush1.bf16.msra.mxu0 0
      %353 = vmatprep.subr.bf16.mxu0 0
      %354 = vmatpush1.bf16.msra.mxu0 0
      %355 = vmatprep.subr.bf16.mxu0 0
      %356 = vmatpush1.bf16.msra.mxu0 %v336
      %357 = vmatprep.subr.bf16.mxu0 0
      %358 = vmatpush2.bf16.msra.mxu0 0
      %359 = vmatprep.subr.bf16.mxu0 0
      %360 = vmatpush2.bf16.msra.mxu0 0
      %361 = vmatprep.subr.bf16.mxu0 0
      %362 = vmatpush2.bf16.msra.mxu0 0
      %363 = vmatprep.subr.bf16.mxu0 0
      %364 = vmatpush2.bf16.msra.mxu0 0
      %365 = vmatprep.subr.bf16.mxu0 0
      %366 = vmatpush2.bf16.msra.mxu0 0
      %367 = vmatprep.subr.bf16.mxu0 0
      %368 = vmatpush2.bf16.msra.mxu0 0
      %369 = vmatprep.subr.bf16.mxu0 0
      %370 = vmatpush2.bf16.msra.mxu0 0
      %371 = vmatprep.subr.bf16.mxu0 0
      %372 = vmatpush2.bf16.msra.mxu0 0
      %373 = vmatprep.mubr.bf16.mxu0 0
      %374 = vmatmul.mubr.bf16.gmra.mxu0 %v339
      %v375 = vpop.f32.mrf.mxu0
      %v376 = vadd.f32 0.0, %v375
      %v377 = vpop.f32.mrf.mxu0
      %v378 = vpop.f32.mrf.mxu0
      %v379 = vadd.f32 0.0, %v378
      %v380 = vpop.f32.mrf.mxu0
      %381 = vdwg.mxu0
      %382 = vrot.lane.b32.xlu0 %v145, 112
      %v383 = vpop.permute.xlu0 %382
      %v386 = vsel %vm294, %v318, 0
      %388 = vmatprep.subr.bf16.mxu0 0
      %389 = vmatpush1.bf16.msra.mxu0 0
      %390 = vmatprep.subr.bf16.mxu0 0
      %391 = vmatpush1.bf16.msra.mxu0 0
      %392 = vmatprep.subr.bf16.mxu0 0
      %393 = vmatpush1.bf16.msra.mxu0 0
      %394 = vmatprep.subr.bf16.mxu0 0
      %395 = vmatpush1.bf16.msra.mxu0 0
      %396 = vmatprep.subr.bf16.mxu0 0
      %397 = vmatpush1.bf16.msra.mxu0 0
      %398 = vmatprep.subr.bf16.mxu0 0
      %399 = vmatpush1.bf16.msra.mxu0 0
      %400 = vmatprep.subr.bf16.mxu0 0
      %401 = vmatpush1.bf16.msra.mxu0 0
      %402 = vmatprep.subr.bf16.mxu0 0
      %403 = vmatpush1.bf16.msra.mxu0 %v383
      %404 = vmatprep.subr.bf16.mxu0 0
      %405 = vmatpush2.bf16.msra.mxu0 0
      %406 = vmatprep.subr.bf16.mxu0 0
      %407 = vmatpush2.bf16.msra.mxu0 0
      %408 = vmatprep.subr.bf16.mxu0 0
      %409 = vmatpush2.bf16.msra.mxu0 0
      %410 = vmatprep.subr.bf16.mxu0 0
      %411 = vmatpush2.bf16.msra.mxu0 0
      %412 = vmatprep.subr.bf16.mxu0 0
      %413 = vmatpush2.bf16.msra.mxu0 0
      %414 = vmatprep.subr.bf16.mxu0 0
      %415 = vmatpush2.bf16.msra.mxu0 0
      %416 = vmatprep.subr.bf16.mxu0 0
      %417 = vmatpush2.bf16.msra.mxu0 0
      %418 = vmatprep.subr.bf16.mxu0 0
      %419 = vmatpush2.bf16.msra.mxu0 0
      %420 = vmatprep.mubr.bf16.mxu0 0
      %421 = vmatmul.mubr.bf16.gmra.mxu0 %v386
      %v422 = vpop.f32.mrf.mxu0
      %v423 = vadd.f32 0.0, %v422
      %v424 = vpop.f32.mrf.mxu0
      %v425 = vpop.f32.mrf.mxu0
      %v426 = vadd.f32 0.0, %v425
      %v427 = vpop.f32.mrf.mxu0
      %428 = vdwg.mxu0
      %v429 = vrcp.pop %v325
      %v430 = vrcp.pop %v328
      %v431 = vrcp.pop %v331
      %v432 = vrcp.pop %v334
      %v433 = vmul.f32 %v376, %v429
      %v434 = vmul.f32 %v379, %v430
      %v435 = vmul.f32 %v423, %v431
      %v436 = vmul.f32 %v426, %v432
      %v437 = vpack.c.bf16 %v434, %v433
      %v438 = vpack.c.bf16 %v436, %v435
      %s439 = smul.addr %s42, 4
      %s440 = scalar_lea.vmem %s4, %s439
      %v441 = vld [vmem:[%s440] sm:$0xf]
      %v443 = vsel %vm149, %v437, 0
      %v446 = vsel %vm149, %v438, 0
      %vm448 = vcmask 1043456
      %v450 = vsel %vm448, %v441, 0
      %452 = vmatprep.subr.bf16.mxu0 0
      %453 = vmatpush1.bf16.msra.mxu0 0
      %454 = vmatprep.subr.bf16.mxu0 0
      %455 = vmatpush1.bf16.msra.mxu0 0
      %456 = vmatprep.subr.bf16.mxu0 0
      %457 = vmatpush1.bf16.msra.mxu0 0
      %458 = vmatprep.subr.bf16.mxu0 0
      %459 = vmatpush1.bf16.msra.mxu0 0
      %460 = vmatprep.subr.bf16.mxu0 0
      %461 = vmatpush1.bf16.msra.mxu0 0
      %462 = vmatprep.subr.bf16.mxu0 0
      %463 = vmatpush1.bf16.msra.mxu0 0
      %464 = vmatprep.subr.bf16.mxu0 0
      %465 = vmatpush1.bf16.msra.mxu0 0
      %466 = vmatprep.subr.bf16.mxu0 0
      %467 = vmatpush1.bf16.msra.mxu0 %v450
      %468 = vmatprep.subr.bf16.mxu0 0
      %469 = vmatpush2.bf16.msra.mxu0 0
      %470 = vmatprep.subr.bf16.mxu0 0
      %471 = vmatpush2.bf16.msra.mxu0 0
      %472 = vmatprep.subr.bf16.mxu0 0
      %473 = vmatpush2.bf16.msra.mxu0 0
      %474 = vmatprep.subr.bf16.mxu0 0
      %475 = vmatpush2.bf16.msra.mxu0 0
      %476 = vmatprep.subr.bf16.mxu0 0
      %477 = vmatpush2.bf16.msra.mxu0 0
      %478 = vmatprep.subr.bf16.mxu0 0
      %479 = vmatpush2.bf16.msra.mxu0 0
      %480 = vmatprep.subr.bf16.mxu0 0
      %481 = vmatpush2.bf16.msra.mxu0 0
      %482 = vmatprep.subr.bf16.mxu0 0
      %483 = vmatpush2.bf16.msra.mxu0 0
      %484 = vmatprep.mubr.bf16.mxu0 0
      %485 = vmatmul.mubr.bf16.gmra.mxu0 %v443
      %v486 = vpop.f32.mrf.mxu0
      %v487 = vadd.f32 0.0, %v486
      %v488 = vpop.f32.mrf.mxu0
      %v489 = vpop.f32.mrf.mxu0
      %v490 = vadd.f32 0.0, %v489
      %v491 = vpop.f32.mrf.mxu0
      %492 = vmatprep.mubr.bf16.mxu0 0
      %493 = vmatmul.mubr.bf16.gmra.mxu0 %v446
      %v494 = vpop.f32.mrf.mxu0
      %v495 = vadd.f32 0.0, %v494
      %v496 = vpop.f32.mrf.mxu0
      %v497 = vpop.f32.mrf.mxu0
      %v498 = vadd.f32 0.0, %v497
      %v499 = vpop.f32.mrf.mxu0
      %500 = vdwg.mxu0
      %v501 = vadd.f32 %v47, %v487
      %v502 = vadd.f32 %v48, %v490
      %v503 = vadd.f32 %v49, %v495
      %v504 = vadd.f32 %v50, %v498
    $region38: #{tpu_custom_call.1} parent=1 // loop_footer
      %s46 = sadd.s32 1, %s42
    $region39: #{tpu_custom_call.1} parent=1 // loop_footer_branch
      %41 = sbr.rel target = $region35
    $region40: #{tpu_custom_call.1} parent=1 // loop_exit
      _
    %v505 = vld [vmem:[%s5] sm:$0x1]
    %v507 = vlaneseq
    %v508 = vshrl.u32 %v507, 7
    %v509 = vsub.s32 0, %v508
    %v510 = vrot.slane %v505, %v509
    %v512 = vadd.f32 %v47, %v510
    %v513 = vadd.f32 %v48, %v510
    %v514 = vadd.f32 %v49, %v510
    %v515 = vadd.f32 %v50, %v510
    %v516 = vpack.c.bf16 %v513, %v512
    %v517 = vpack.c.bf16 %v515, %v514
    %v518 = vld [vmem:[%s6] sm:$0x1]
    %v519 = vunpack.c.l.bf16 %v516
    %v520 = vunpack.c.h.bf16 %v516
    %v521 = vunpack.c.l.bf16 %v517
    %v522 = vunpack.c.h.bf16 %v517
    %v524 = vlaneseq
    %v525 = vshrl.u32 %v524, 7
    %v526 = vsub.s32 0, %v525
    %v527 = vrot.slane %v518, %v526
    %v529 = vmul.f32 %v519, %v527
    %v530 = vmul.f32 %v520, %v527
    %v531 = vmul.f32 %v521, %v527
    %v532 = vmul.f32 %v522, %v527
    %vm533 = vcmask 261120
    %v534 = vsel %vm533, %v529, 0.0
    %535 = vadd.xlane.f32.xlu0 %v534
    %v536 = vpop.xlane.xlu0 %535
    %v537 = vsel %vm533, %v530, 0.0
    %538 = vadd.xlane.f32.xlu0 %v537
    %v539 = vpop.xlane.xlu0 %538
    %v540 = vsel %vm533, %v531, 0.0
    %541 = vadd.xlane.f32.xlu0 %v540
    %v542 = vpop.xlane.xlu0 %541
    %v543 = vsel %vm533, %v532, 0.0
    %544 = vadd.xlane.f32.xlu0 %v543
    %v545 = vpop.xlane.xlu0 %544
    %v546 = vld [vmem:[#allocation2] sm:$0x1]
    %v548 = vlaneseq
    %v549 = vshrl.u32 %v548, 7
    %v550 = vsub.s32 0, %v549
    %v551 = vrot.slane %v546, %v550
    %552 = vset.pattern.permute.xlu0 0
    %553 = vperm.xlu0 %552, %v551
    %v554 = vpop.permute.xlu0 %553
    %v556 = vadd.f32 %v536, %v554
    %v557 = vadd.f32 %v539, %v554
    %v558 = vadd.f32 %v542, %v554
    %v559 = vadd.f32 %v545, %v554
    %vm560 = vcmp.gt.f32.partialorder %v40, 0.0
    %v565 = vlaneseq
    %v566 = vand.u32 %v565, 127
    %v567 = vlaneseq
    %v568 = vshrl.u32 %v567, 7
    %v569 = vsub.s32 %v566, %v568
    %v570 = vrot.slane %v556, %v569
    %v571 = vadd.s32 %v566, 4294967288
    %v572 = vlaneseq
    %v573 = vshrl.u32 %v572, 7
    %v574 = vsub.s32 %v571, %v573
    %v575 = vrot.slane %v557, %v574
    %vm576 = vcmask 130112
    %v577 = vsel %vm576, %v575, %v570
    %v578 = vlaneseq
    %v579 = vshrl.u32 %v578, 7
    %v580 = vsub.s32 %v566, %v579
    %v581 = vrot.slane %v558, %v580
    %v582 = vlaneseq
    %v583 = vshrl.u32 %v582, 7
    %v584 = vsub.s32 %v571, %v583
    %v585 = vrot.slane %v559, %v584
    %v586 = vsel %vm576, %v585, %v581
    %vm587 = vcmask 1041409
    %v588 = vsel %vm587, %v586, %v577
    %v590 = vsel %vm560, %v588, -1e+30
    %vm591 = vcmask 123904
    %v592 = vsel %vm591, %v590, -inf
    %593 = vmax.xlane.f32.xlu0 %v592
    %v594 = vpop.xlane.xlu0 %593
    %v595 = vsub.f32 %v590, %v594
    %v596 = vmul.f32 %v595, 1.442695
    %v597 = vpow.pop %v596
    %v598 = vsel %vm591, %v597, 0.0
    %599 = vadd.xlane.f32.xlu0 %v598
    %v600 = vpop.xlane.xlu0 %599
    %v601 = vrcp.pop %v600
    %v602 = vmul.f32 %v597, %v601
    %v603 = vpack.c.bf16 %v602, %v602
    %v606 = vunpack.c.l.s4 1966171168
    %v607 = vunpack.c.0.s8 %v606
    %v608 = vlaneseq
    %v609 = vshrl.u32 %v608, 7
    %v610 = vsub.s32 %v607, %v609
    %v611 = vrot.slane %v603, %v610
    %v613 = vunpack.c.l.s4 1966171168
    %v614 = vunpack.c.0.s8 %v613
    %v615 = vlaneseq
    %v616 = vshrl.u32 %v615, 7
    %v617 = vsub.s32 %v614, %v616
    %v618 = vrot.slane %v611, %v617
    %v619 = vunpack.i.l.s16 %v618
    %v620 = vunpack.i.h.s16 %v618
    %v621 = vpack.i.b16 %v619, %v619
    %v622 = vlaneseq
    %v623 = vshrl.u32 %v622, 7
    %v624 = vsub.s32 0, %v623
    %v625 = vrot.slane %v621, %v624
    %vm626 = vcmask 130048
    %v628 = vsel %vm626, %v625, 0
    %630 = vmatprep.subr.bf16.mxu0 0
    %631 = vmatpush1.bf16.msra.mxu0 0
    %632 = vmatprep.subr.bf16.mxu0 0
    %633 = vmatpush1.bf16.msra.mxu0 0
    %634 = vmatprep.subr.bf16.mxu0 0
    %635 = vmatpush1.bf16.msra.mxu0 0
    %636 = vmatprep.subr.bf16.mxu0 0
    %637 = vmatpush1.bf16.msra.mxu0 0
    %638 = vmatprep.subr.bf16.mxu0 0
    %639 = vmatpush1.bf16.msra.mxu0 0
    %640 = vmatprep.subr.bf16.mxu0 0
    %641 = vmatpush1.bf16.msra.mxu0 0
    %642 = vmatprep.subr.bf16.mxu0 0
    %643 = vmatpush1.bf16.msra.mxu0 0
    %644 = vmatprep.subr.bf16.mxu0 0
    %645 = vmatpush1.bf16.msra.mxu0 %v516
    %646 = vmatprep.subr.bf16.mxu0 0
    %647 = vmatpush2.bf16.msra.mxu0 0
    %648 = vmatprep.subr.bf16.mxu0 0
    %649 = vmatpush2.bf16.msra.mxu0 0
    %650 = vmatprep.subr.bf16.mxu0 0
    %651 = vmatpush2.bf16.msra.mxu0 0
    %652 = vmatprep.subr.bf16.mxu0 0
    %653 = vmatpush2.bf16.msra.mxu0 0
    %654 = vmatprep.subr.bf16.mxu0 0
    %655 = vmatpush2.bf16.msra.mxu0 0
    %656 = vmatprep.subr.bf16.mxu0 0
    %657 = vmatpush2.bf16.msra.mxu0 0
    %658 = vmatprep.subr.bf16.mxu0 0
    %659 = vmatpush2.bf16.msra.mxu0 0
    %660 = vmatprep.subr.bf16.mxu0 0
    %661 = vmatpush2.bf16.msra.mxu0 0
    %662 = vmatprep.mubr.bf16.mxu0 0
    %663 = vmatmul.mubr.bf16.gmra.mxu0 %v628
    %v664 = vpop.f32.mrf.mxu0
    %v665 = vadd.f32 0.0, %v664
    %v666 = vpop.f32.mrf.mxu0
    %v667 = vpop.f32.mrf.mxu0
    %v668 = vpop.f32.mrf.mxu0
    %669 = vdwg.mxu0
    %v670 = vpack.i.b16 %v620, %v620
    %v671 = vlaneseq
    %v672 = vshrl.u32 %v671, 7
    %v673 = vsub.s32 0, %v672
    %v674 = vrot.slane %v670, %v673
    %v676 = vsel %vm626, %v674, 0
    %678 = vmatprep.subr.bf16.mxu0 0
    %679 = vmatpush1.bf16.msra.mxu0 0
    %680 = vmatprep.subr.bf16.mxu0 0
    %681 = vmatpush1.bf16.msra.mxu0 0
    %682 = vmatprep.subr.bf16.mxu0 0
    %683 = vmatpush1.bf16.msra.mxu0 0
    %684 = vmatprep.subr.bf16.mxu0 0
    %685 = vmatpush1.bf16.msra.mxu0 0
    %686 = vmatprep.subr.bf16.mxu0 0
    %687 = vmatpush1.bf16.msra.mxu0 0
    %688 = vmatprep.subr.bf16.mxu0 0
    %689 = vmatpush1.bf16.msra.mxu0 0
    %690 = vmatprep.subr.bf16.mxu0 0
    %691 = vmatpush1.bf16.msra.mxu0 0
    %692 = vmatprep.subr.bf16.mxu0 0
    %693 = vmatpush1.bf16.msra.mxu0 %v517
    %694 = vmatprep.subr.bf16.mxu0 0
    %695 = vmatpush2.bf16.msra.mxu0 0
    %696 = vmatprep.subr.bf16.mxu0 0
    %697 = vmatpush2.bf16.msra.mxu0 0
    %698 = vmatprep.subr.bf16.mxu0 0
    %699 = vmatpush2.bf16.msra.mxu0 0
    %700 = vmatprep.subr.bf16.mxu0 0
    %701 = vmatpush2.bf16.msra.mxu0 0
    %702 = vmatprep.subr.bf16.mxu0 0
    %703 = vmatpush2.bf16.msra.mxu0 0
    %704 = vmatprep.subr.bf16.mxu0 0
    %705 = vmatpush2.bf16.msra.mxu0 0
    %706 = vmatprep.subr.bf16.mxu0 0
    %707 = vmatpush2.bf16.msra.mxu0 0
    %708 = vmatprep.subr.bf16.mxu0 0
    %709 = vmatpush2.bf16.msra.mxu0 0
    %710 = vmatprep.mubr.bf16.mxu0 0
    %711 = vmatmul.mubr.bf16.gmra.mxu0 %v676
    %v712 = vpop.f32.mrf.mxu0
    %v713 = vadd.f32 0.0, %v712
    %v714 = vpop.f32.mrf.mxu0
    %v715 = vpop.f32.mrf.mxu0
    %v716 = vpop.f32.mrf.mxu0
    %717 = vdwg.mxu0
    %v718 = vmul.bf16 %v516, %v516
    %v719 = vmul.bf16 %v517, %v517
    %720 = vmatprep.subr.bf16.mxu0 0
    %721 = vmatpush1.bf16.msra.mxu0 0
    %722 = vmatprep.subr.bf16.mxu0 0
    %723 = vmatpush1.bf16.msra.mxu0 0
    %724 = vmatprep.subr.bf16.mxu0 0
    %725 = vmatpush1.bf16.msra.mxu0 0
    %726 = vmatprep.subr.bf16.mxu0 0
    %727 = vmatpush1.bf16.msra.mxu0 0
    %728 = vmatprep.subr.bf16.mxu0 0
    %729 = vmatpush1.bf16.msra.mxu0 0
    %730 = vmatprep.subr.bf16.mxu0 0
    %731 = vmatpush1.bf16.msra.mxu0 0
    %732 = vmatprep.subr.bf16.mxu0 0
    %733 = vmatpush1.bf16.msra.mxu0 0
    %734 = vmatprep.subr.bf16.mxu0 0
    %735 = vmatpush1.bf16.msra.mxu0 %v718
    %736 = vmatprep.subr.bf16.mxu0 0
    %737 = vmatpush2.bf16.msra.mxu0 0
    %738 = vmatprep.subr.bf16.mxu0 0
    %739 = vmatpush2.bf16.msra.mxu0 0
    %740 = vmatprep.subr.bf16.mxu0 0
    %741 = vmatpush2.bf16.msra.mxu0 0
    %742 = vmatprep.subr.bf16.mxu0 0
    %743 = vmatpush2.bf16.msra.mxu0 0
    %744 = vmatprep.subr.bf16.mxu0 0
    %745 = vmatpush2.bf16.msra.mxu0 0
    %746 = vmatprep.subr.bf16.mxu0 0
    %747 = vmatpush2.bf16.msra.mxu0 0
    %748 = vmatprep.subr.bf16.mxu0 0
    %749 = vmatpush2.bf16.msra.mxu0 0
    %750 = vmatprep.subr.bf16.mxu0 0
    %751 = vmatpush2.bf16.msra.mxu0 0
    %752 = vmatprep.mubr.bf16.mxu0 0
    %753 = vmatmul.mubr.bf16.gmra.mxu0 %v628
    %v754 = vpop.f32.mrf.mxu0
    %v755 = vadd.f32 0.0, %v754
    %v756 = vpop.f32.mrf.mxu0
    %v757 = vpop.f32.mrf.mxu0
    %v758 = vpop.f32.mrf.mxu0
    %759 = vdwg.mxu0
    %760 = vmatprep.subr.bf16.mxu0 0
    %761 = vmatpush1.bf16.msra.mxu0 0
    %762 = vmatprep.subr.bf16.mxu0 0
    %763 = vmatpush1.bf16.msra.mxu0 0
    %764 = vmatprep.subr.bf16.mxu0 0
    %765 = vmatpush1.bf16.msra.mxu0 0
    %766 = vmatprep.subr.bf16.mxu0 0
    %767 = vmatpush1.bf16.msra.mxu0 0
    %768 = vmatprep.subr.bf16.mxu0 0
    %769 = vmatpush1.bf16.msra.mxu0 0
    %770 = vmatprep.subr.bf16.mxu0 0
    %771 = vmatpush1.bf16.msra.mxu0 0
    %772 = vmatprep.subr.bf16.mxu0 0
    %773 = vmatpush1.bf16.msra.mxu0 0
    %774 = vmatprep.subr.bf16.mxu0 0
    %775 = vmatpush1.bf16.msra.mxu0 %v719
    %776 = vmatprep.subr.bf16.mxu0 0
    %777 = vmatpush2.bf16.msra.mxu0 0
    %778 = vmatprep.subr.bf16.mxu0 0
    %779 = vmatpush2.bf16.msra.mxu0 0
    %780 = vmatprep.subr.bf16.mxu0 0
    %781 = vmatpush2.bf16.msra.mxu0 0
    %782 = vmatprep.subr.bf16.mxu0 0
    %783 = vmatpush2.bf16.msra.mxu0 0
    %784 = vmatprep.subr.bf16.mxu0 0
    %785 = vmatpush2.bf16.msra.mxu0 0
    %786 = vmatprep.subr.bf16.mxu0 0
    %787 = vmatpush2.bf16.msra.mxu0 0
    %788 = vmatprep.subr.bf16.mxu0 0
    %789 = vmatpush2.bf16.msra.mxu0 0
    %790 = vmatprep.subr.bf16.mxu0 0
    %791 = vmatpush2.bf16.msra.mxu0 0
    %792 = vmatprep.mubr.bf16.mxu0 0
    %793 = vmatmul.mubr.bf16.gmra.mxu0 %v676
    %v794 = vpop.f32.mrf.mxu0
    %v795 = vadd.f32 0.0, %v794
    %v796 = vpop.f32.mrf.mxu0
    %v797 = vpop.f32.mrf.mxu0
    %v798 = vpop.f32.mrf.mxu0
    %799 = vdwg.mxu0
    %v800 = vmul.f32 %v665, %v665
    %v801 = vmul.f32 %v713, %v713
    %v802 = vsub.f32 %v755, %v800
    %v803 = vsub.f32 %v795, %v801
    %v804 = vmax.f32 %v802, 1e-09
    %v805 = vmax.f32 %v803, 1e-09
    %v806 = vrsqrt.pop %v804
    %v807 = vmul.f32 %v804, %v806
    %vm808 = vcmp.eq.f32.partialorder %v804, inf
    %v809 = vsel %vm808, %v804, %v807
    %vm810 = vcmp.eq.f32.partialorder %v804, 0.0
    %v811 = vand.u32 %v804, 2147483648
    %v812 = vsel %vm810, %v811, %v809
    %v813 = vrsqrt.pop %v805
    %v814 = vmul.f32 %v805, %v813
    %vm815 = vcmp.eq.f32.partialorder %v805, inf
    %v816 = vsel %vm815, %v805, %v814
    %vm817 = vcmp.eq.f32.partialorder %v805, 0.0
    %v818 = vand.u32 %v805, 2147483648
    %v819 = vsel %vm817, %v818, %v816
    %v822 = vrot.slane %v713, 7
    %v823 = vsel %vm587, %v822, %v665
    %vm825 = vcmask 254976
    %826 = vst.msk [vmem:[#allocation3] sm:$0x3] %vm825, %v823
    %v829 = vrot.slane %v819, 7
    %v830 = vsel %vm587, %v829, %v812
    %832 = vst.msk [vmem:[#allocation5] sm:$0x3] %vm825, %v830
    // Predicated region
    $region41: #{tpu_custom_call.1} parent=1 // pred_check
      _
    $region42: #{tpu_custom_call.1} parent=1 // pred_check_branch
      %834 = sbr.rel (0) target = $region44
    $region43: #{tpu_custom_call.1} parent=1 // pred_region
      %s836 = ssub.s32 32, 32
      %837 = vsyncadd [#allocation4], %s836
      %s839 = sshll.u32 [#allocation3], 4
      %s840 = int_to_ptr.vmem [resolvable:$true] %s839
      %842 = dma.vmem_to_hbm [thread:$0]  %s840, 32, %s8, [#allocation4]
    $region44: #{tpu_custom_call.1} parent=1 // pred_fallthru
      _
    // Predicated region
    $region45: #{tpu_custom_call.1} parent=1 // pred_check
      _
    $region46: #{tpu_custom_call.1} parent=1 // pred_check_branch
      %844 = sbr.rel (0) target = $region48
    $region47: #{tpu_custom_call.1} parent=1 // pred_region
      %s846 = ssub.s32 32, 32
      %847 = vsyncadd [#allocation6], %s846
      %s849 = sshll.u32 [#allocation5], 4
      %s850 = int_to_ptr.vmem [resolvable:$true] %s849
      %852 = dma.vmem_to_hbm [thread:$0]  %s850, 32, %s9, [#allocation6]
    $region48: #{tpu_custom_call.1} parent=1 // pred_fallthru
      _
    // Predicated region
    $region49: #{tpu_custom_call.1} parent=1 // pred_check
      _
    $region50: #{tpu_custom_call.1} parent=1 // pred_check_branch
      %854 = sbr.rel (0) target = $region52
    $region51: #{tpu_custom_call.1} parent=1 // pred_region
      %855 = dma.done [#allocation4], 32
    $region52: #{tpu_custom_call.1} parent=1 // pred_fallthru
      _
    // Predicated region
    $region53: #{tpu_custom_call.1} parent=1 // pred_check
      _
    $region54: #{tpu_custom_call.1} parent=1 // pred_check_branch
      %857 = sbr.rel (0) target = $region56
    $region55: #{tpu_custom_call.1} parent=1 // pred_region
      %858 = dma.done [#allocation6], 32
    $region56: #{tpu_custom_call.1} parent=1 // pred_fallthru
      _
    %859 = vsyncpa [#allocation4], 1
    %860 = vsyncpa [#allocation6], 1

</llo_original>
